<compile_context>
chip_gen: v6e
topology: v6e:2x2x1
jax: 0.10.0
libtpu: 0.0.40
codegen_flags: <defaults>
</compile_context>

<pallas_src>
import functools

import jax
import jax.numpy as jnp
from jax.experimental import pallas as pl
from jax.experimental.pallas import tpu as pltpu


def _round_up(n, m):
    return ((n + m - 1) // m) * m


def _make_kernel(num_hidden, use_sc_matmul, compute_dtype):
    """Fused residual-MLP kernel body.

    Ref order:
      x, W_0..W_{nh-1}, W_last, [W_sc], b_0..b_{nh-1}, b_final, out
    """

    def kernel(*refs):
        p = 0
        x_ref = refs[p]; p += 1
        w_refs = refs[p:p + num_hidden + 1]; p += num_hidden + 1
        if use_sc_matmul:
            w_sc_ref = refs[p]; p += 1
        b_refs = refs[p:p + num_hidden + 1]; p += num_hidden + 1
        o_ref = refs[p]

        x = x_ref[...]                       # already compute_dtype (wrapper cast)

        # Hidden layers: Linear + ReLU; intermediates stay in vregs.
        h = x
        for i in range(num_hidden):
            h = jnp.dot(h, w_refs[i][...], preferred_element_type=jnp.float32)
            h = jnp.maximum(h + b_refs[i][...], 0.0).astype(compute_dtype)

        # Final Linear; shortcut either as a second accumulating MXU dot
        # (linear shortcut, or identity folded into an identity weight when the
        # out-dim is lane-padded) or as a direct elementwise add.
        y = jnp.dot(h, w_refs[num_hidden][...], preferred_element_type=jnp.float32)
        if use_sc_matmul:
            y = y + jnp.dot(x, w_sc_ref[...], preferred_element_type=jnp.float32)
        else:
            y = y + x.astype(jnp.float32)    # identity shortcut, dims match
        y = y + b_refs[num_hidden][...]

        o_ref[...] = jnp.maximum(y, 0.0).astype(o_ref.dtype)

    return kernel


def _choose_tm(n_rows, tm_max=8192):
    """Tall batch tile (amortize per-grid-step overhead), even grid length
    (balance the two v7x TensorCores under dimension_semantics=("parallel",))."""
    if n_rows <= 2 * 128:
        return 128
    n_tiles = max(2, 2 * pl.cdiv(pl.cdiv(n_rows, tm_max), 2))     # even, >= 2
    tm = pl.cdiv(pl.cdiv(n_rows, n_tiles), 128) * 128
    return max(128, min(tm, tm_max))


def fc_residual_block(x, weights, biases, shortcut_w=None, shortcut_b=None, *,
                      tm=None, tm_max=8192, compute_dtype=jnp.bfloat16,
                      out_dtype=None, lane_pad_output=True):
    """Fused forward pass of FullyConnectedResidualBlock.

    x:            (N, dim_in)
    weights[i]:   (dims[i], dims[i+1])   (transposed vs. PyTorch nn.Linear)
    biases[i]:    (1, dims[i+1]) or (dims[i+1],)
    shortcut_w/b: linear shortcut params (dim_in != dim_out) or None (identity)
    NOTE: compute_dtype=bf16 (default) changes numerics vs. the f32 PyTorch
    module; pass compute_dtype=jnp.float32 for exact semantics.
    """
    N, dim_in = x.shape
    num_layers = len(weights)
    num_hidden = num_layers - 1
    dim_out = weights[-1].shape[1]
    out_dtype = x.dtype if out_dtype is None else out_dtype

    pad_out = _round_up(dim_out, 128) if lane_pad_output else dim_out
    identity_shortcut = shortcut_w is None
    # Identity shortcut + lane-padded out-dim -> fold the identity into an MXU
    # dot (exact: 1.0 * x accumulated in f32) so no in-kernel lane splicing.
    use_sc_matmul = (not identity_shortcut) or (pad_out != dim_out)

    def pad_cols(a, target):
        a = jnp.reshape(a, (a.shape[0], -1)) if a.ndim == 2 else jnp.reshape(a, (1, -1))
        extra = target - a.shape[-1]
        return a if extra == 0 else jnp.pad(a, ((0, 0), (0, extra)))

    # ---- parameter packing (once, outside the kernel) -----------------------
    w_hidden = [w.astype(compute_dtype) for w in weights[:-1]]
    b_hidden = [jnp.reshape(b, (1, -1)).astype(jnp.float32) for b in biases[:-1]]

    w_last = pad_cols(weights[-1], pad_out).astype(compute_dtype)
    b_final = pad_cols(jnp.reshape(biases[-1], (1, -1)), pad_out).astype(jnp.float32)
    w_sc = None
    if not identity_shortcut:
        w_sc = pad_cols(shortcut_w, pad_out).astype(compute_dtype)
        b_final = b_final + pad_cols(jnp.reshape(shortcut_b, (1, -1)),
                                     pad_out).astype(jnp.float32)
    elif use_sc_matmul:
        w_sc = pad_cols(jnp.eye(dim_in, dtype=jnp.float32),
                        pad_out).astype(compute_dtype)

    # Cast x once in the wrapper: fewer kernel DMA bytes, no per-tile VPU cast.
    x_in = x.astype(compute_dtype)

    # ---- batch tiling (ragged N handled by Pallas boundary-block masking) ----
    if tm is None:
        tm = _choose_tm(N, tm_max)
    n_tiles = pl.cdiv(N, tm)

    kernel = _make_kernel(num_hidden, use_sc_matmul, compute_dtype)

    # Input tile marches over the batch; parameters are resident (block 0,0).
    in_specs = [pl.BlockSpec((tm, dim_in), lambda i: (i, 0))]
    operands = [x_in]
    param_list = w_hidden + [w_last] + ([w_sc] if use_sc_matmul else []) \
        + b_hidden + [b_final]
    for p in param_list:
        in_specs.append(pl.BlockSpec(p.shape, lambda i: (0, 0)))
        operands.append(p)

    out = pl.pallas_call(
        kernel,
        out_shape=jax.ShapeDtypeStruct((N, pad_out), out_dtype),
        grid=(n_tiles,),
        in_specs=in_specs,
        out_specs=pl.BlockSpec((tm, pad_out), lambda i: (i, 0)),
        compiler_params=pltpu.CompilerParams(
            dimension_semantics=("parallel",)),
    )(*operands)

    return out if pad_out == dim_out else out[:, :dim_out]


def init_params(key, dims):
    """PyTorch-style uniform init: U(-1/sqrt(fan_in), 1/sqrt(fan_in))."""
    weights, biases = [], []
    for i in range(len(dims) - 1):
        fan_in, fan_out = dims[i], dims[i + 1]
        key, kw, kb = jax.random.split(key, 3)
        bound = 1.0 / jnp.sqrt(fan_in)
        weights.append(jax.random.uniform(kw, (fan_in, fan_out), jnp.float32,
                                          -bound, bound))
        biases.append(jax.random.uniform(kb, (1, fan_out), jnp.float32,
                                         -bound, bound))
    return key, weights, biases


def reference_forward(x, weights, biases, shortcut_w, shortcut_b):
    """Plain-JAX reference mirroring the PyTorch module semantics."""
    h = x
    n = len(weights)
    for i, (w, b) in enumerate(zip(weights, biases)):
        h = h @ w + jnp.reshape(b, (1, -1))
        if i < n - 1:
            h = jnp.maximum(h, 0.0)
    sc = x if shortcut_w is None else x @ shortcut_w + jnp.reshape(shortcut_b, (1, -1))
    return jnp.maximum(h + sc, 0.0)


if __name__ == "__main__":
    key = jax.random.PRNGKey(0)

    # ---- config 1: dim_in != dim_out -> Linear shortcut ----------------------
    dim_in, dims_hidden, dim_out = 32, [64, 64], 48
    dims = [dim_in] + dims_hidden + [dim_out]
    N = 256

    key, weights, biases = init_params(key, dims)
    key, ksw, ksb, kx = jax.random.split(key, 4)
    sbound = 1.0 / jnp.sqrt(dim_in)
    shortcut_w = jax.random.uniform(ksw, (dim_in, dim_out), jnp.float32,
                                    -sbound, sbound)
    shortcut_b = jax.random.uniform(ksb, (1, dim_out), jnp.float32,
                                    -sbound, sbound)
    x = jax.random.normal(kx, (N, dim_in), jnp.float32)

    ref = reference_forward(x, weights, biases, shortcut_w, shortcut_b)

    # Exact-semantics f32 path (tight tolerance).
    out_f32 = jax.block_until_ready(
        fc_residual_block(x, weights, biases, shortcut_w, shortcut_b,
                          compute_dtype=jnp.float32))
    assert out_f32.shape == (N, dim_out)
    assert jnp.allclose(out_f32, ref, atol=1e-4, rtol=1e-4), "f32 mismatch"

    # Default bf16-weight/activation path (looser tolerance).
    out_bf16 = jax.block_until_ready(
        fc_residual_block(x, weights, biases, shortcut_w, shortcut_b))
    assert jnp.allclose(out_bf16, ref, atol=5e-2, rtol=5e-2), "bf16 mismatch"

    # Ragged batch exercises the masked boundary block (no jnp.pad of x).
    x_ragged = x[:200]
    out_r = jax.block_until_ready(
        fc_residual_block(x_ragged, weights, biases, shortcut_w, shortcut_b))
    assert out_r.shape == (200, dim_out)
    assert jnp.allclose(out_r, ref[:200], atol=5e-2, rtol=5e-2), "ragged mismatch"

    # ---- config 2: dim_in == dim_out -> identity shortcut --------------------
    dims2 = [64, 64, 64]
    key, w2, b2 = init_params(key, dims2)
    key, kx2 = jax.random.split(key)
    x2 = jax.random.normal(kx2, (256, 64), jnp.float32)
    ref2 = reference_forward(x2, w2, b2, None, None)

    # Lane-padded output (identity folded into an identity-weight MXU dot).
    out2 = jax.block_until_ready(fc_residual_block(x2, w2, b2))
    assert out2.shape == (256, 64)
    assert jnp.allclose(out2, ref2, atol=5e-2, rtol=5e-2), \
        "identity-shortcut (lane-padded) mismatch"

    # Unpadded output path (direct in-kernel residual add).
    out2b = jax.block_until_ready(
        fc_residual_block(x2, w2, b2, lane_pad_output=False))
    assert jnp.allclose(out2b, ref2, atol=5e-2, rtol=5e-2), \
        "identity-shortcut (unpadded) mismatch"

    print("KERNEL_OK")
</pallas_src>

<mosaic_0001>
module attributes {stable_mosaic.version = 11 : i64} {
  func.func @kernel(%arg0: i32, %arg1: memref<128x32xf32, #tpu.memory_space<vmem>>, %arg2: memref<32x64xf32, #tpu.memory_space<vmem>>, %arg3: memref<64x64xf32, #tpu.memory_space<vmem>>, %arg4: memref<64x128xf32, #tpu.memory_space<vmem>>, %arg5: memref<32x128xf32, #tpu.memory_space<vmem>>, %arg6: memref<1x64xf32, #tpu.memory_space<vmem>>, %arg7: memref<1x64xf32, #tpu.memory_space<vmem>>, %arg8: memref<1x128xf32, #tpu.memory_space<vmem>>, %arg9: memref<128x128xf32, #tpu.memory_space<vmem>>) attributes {dimension_semantics = [#tpu.dimension_semantics<parallel>], iteration_bounds = array<i64: 2>, scalar_prefetch = 0 : i64, scratch_operands = 0 : i64, tpu.core_type = #tpu.core_type<tc>, window_params = [{transform_indices = @transform_0, window_bounds = array<i64: 128, 32>}, {pipeline_mode = #tpu.pipeline_mode<synchronous>, transform_indices = @transform_1, window_bounds = array<i64: 32, 64>}, {pipeline_mode = #tpu.pipeline_mode<synchronous>, transform_indices = @transform_2, window_bounds = array<i64: 64, 64>}, {pipeline_mode = #tpu.pipeline_mode<synchronous>, transform_indices = @transform_3, window_bounds = array<i64: 64, 128>}, {pipeline_mode = #tpu.pipeline_mode<synchronous>, transform_indices = @transform_4, window_bounds = array<i64: 32, 128>}, {pipeline_mode = #tpu.pipeline_mode<synchronous>, transform_indices = @transform_5, window_bounds = array<i64: 1, 64>}, {pipeline_mode = #tpu.pipeline_mode<synchronous>, transform_indices = @transform_6, window_bounds = array<i64: 1, 64>}, {pipeline_mode = #tpu.pipeline_mode<synchronous>, transform_indices = @transform_7, window_bounds = array<i64: 1, 128>}, {transform_indices = @transform_8, window_bounds = array<i64: 128, 128>}]} {
    %c0 = arith.constant 0 : index
    %c0_0 = arith.constant 0 : index
    %0 = vector.load %arg1[%c0, %c0_0] : memref<128x32xf32, #tpu.memory_space<vmem>>, vector<128x32xf32>
    %c0_1 = arith.constant 0 : index
    %c0_2 = arith.constant 0 : index
    %1 = vector.load %arg2[%c0_1, %c0_2] : memref<32x64xf32, #tpu.memory_space<vmem>>, vector<32x64xf32>
    %cst = arith.constant dense<0.000000e+00> : vector<128x64xf32>
    %2 = tpu.matmul %0, %1, %cst {dimension_numbers = #tpu.dot_dimension_numbers<[1], [0], [0], [1], [0, 0, 1, 1], [], []>} : vector<128x32xf32>, vector<32x64xf32>, vector<128x64xf32> -> vector<128x64xf32>
    %c0_3 = arith.constant 0 : index
    %c0_4 = arith.constant 0 : index
    %3 = vector.load %arg6[%c0_3, %c0_4] : memref<1x64xf32, #tpu.memory_space<vmem>>, vector<1x64xf32>
    %4 = vector.broadcast %3 : vector<1x64xf32> to vector<128x64xf32>
    %5 = arith.addf %2, %4 : vector<128x64xf32>
    %cst_5 = arith.constant 0.000000e+00 : f32
    %6 = vector.broadcast %cst_5 : f32 to vector<128x64xf32>
    %7 = arith.maximumf %5, %6 : vector<128x64xf32>
    %c0_6 = arith.constant 0 : index
    %c0_7 = arith.constant 0 : index
    %8 = vector.load %arg3[%c0_6, %c0_7] : memref<64x64xf32, #tpu.memory_space<vmem>>, vector<64x64xf32>
    %cst_8 = arith.constant dense<0.000000e+00> : vector<128x64xf32>
    %9 = tpu.matmul %7, %8, %cst_8 {dimension_numbers = #tpu.dot_dimension_numbers<[1], [0], [0], [1], [0, 0, 1, 1], [], []>} : vector<128x64xf32>, vector<64x64xf32>, vector<128x64xf32> -> vector<128x64xf32>
    %c0_9 = arith.constant 0 : index
    %c0_10 = arith.constant 0 : index
    %10 = vector.load %arg7[%c0_9, %c0_10] : memref<1x64xf32, #tpu.memory_space<vmem>>, vector<1x64xf32>
    %11 = vector.broadcast %10 : vector<1x64xf32> to vector<128x64xf32>
    %12 = arith.addf %9, %11 : vector<128x64xf32>
    %cst_11 = arith.constant 0.000000e+00 : f32
    %13 = vector.broadcast %cst_11 : f32 to vector<128x64xf32>
    %14 = arith.maximumf %12, %13 : vector<128x64xf32>
    %c0_12 = arith.constant 0 : index
    %c0_13 = arith.constant 0 : index
    %15 = vector.load %arg4[%c0_12, %c0_13] : memref<64x128xf32, #tpu.memory_space<vmem>>, vector<64x128xf32>
    %cst_14 = arith.constant dense<0.000000e+00> : vector<128x128xf32>
    %16 = tpu.matmul %14, %15, %cst_14 {dimension_numbers = #tpu.dot_dimension_numbers<[1], [0], [0], [1], [0, 0, 1, 1], [], []>} : vector<128x64xf32>, vector<64x128xf32>, vector<128x128xf32> -> vector<128x128xf32>
    %c0_15 = arith.constant 0 : index
    %c0_16 = arith.constant 0 : index
    %17 = vector.load %arg5[%c0_15, %c0_16] : memref<32x128xf32, #tpu.memory_space<vmem>>, vector<32x128xf32>
    %cst_17 = arith.constant dense<0.000000e+00> : vector<128x128xf32>
    %18 = tpu.matmul %0, %17, %cst_17 {dimension_numbers = #tpu.dot_dimension_numbers<[1], [0], [0], [1], [0, 0, 1, 1], [], []>} : vector<128x32xf32>, vector<32x128xf32>, vector<128x128xf32> -> vector<128x128xf32>
    %19 = arith.addf %16, %18 : vector<128x128xf32>
    %c0_18 = arith.constant 0 : index
    %c0_19 = arith.constant 0 : index
    %20 = vector.load %arg8[%c0_18, %c0_19] : memref<1x128xf32, #tpu.memory_space<vmem>>, vector<1x128xf32>
    %21 = vector.broadcast %20 : vector<1x128xf32> to vector<128x128xf32>
    %22 = arith.addf %19, %21 : vector<128x128xf32>
    %cst_20 = arith.constant 0.000000e+00 : f32
    %23 = vector.broadcast %cst_20 : f32 to vector<128x128xf32>
    %24 = arith.maximumf %22, %23 : vector<128x128xf32>
    %c0_21 = arith.constant 0 : index
    %c0_22 = arith.constant 0 : index
    %25 = vector.load %arg9[%c0_21, %c0_22] : memref<128x128xf32, #tpu.memory_space<vmem>>, vector<128x128xf32>
    tpu.vector_store %arg9[%c0_21, %c0_22], %24 {strides = array<i32>} : memref<128x128xf32, #tpu.memory_space<vmem>>, vector<128x128xf32>,
    return
  }
  func.func @transform_0(%arg0: i32) -> (i32, i32) {
    %c0_i32 = arith.constant 0 : i32
    %c0_i32_0 = arith.constant 0 : i32
    return %arg0, %c0_i32 : i32, i32
  }
  func.func @transform_1(%arg0: i32) -> (i32, i32) {
    %c0_i32 = arith.constant 0 : i32
    %c0_i32_0 = arith.constant 0 : i32
    %c0_i32_1 = arith.constant 0 : i32
    return %c0_i32, %c0_i32_0 : i32, i32
  }
  func.func @transform_2(%arg0: i32) -> (i32, i32) {
    %c0_i32 = arith.constant 0 : i32
    %c0_i32_0 = arith.constant 0 : i32
    %c0_i32_1 = arith.constant 0 : i32
    return %c0_i32, %c0_i32_0 : i32, i32
  }
  func.func @transform_3(%arg0: i32) -> (i32, i32) {
    %c0_i32 = arith.constant 0 : i32
    %c0_i32_0 = arith.constant 0 : i32
    %c0_i32_1 = arith.constant 0 : i32
    return %c0_i32, %c0_i32_0 : i32, i32
  }
  func.func @transform_4(%arg0: i32) -> (i32, i32) {
    %c0_i32 = arith.constant 0 : i32
    %c0_i32_0 = arith.constant 0 : i32
    %c0_i32_1 = arith.constant 0 : i32
    return %c0_i32, %c0_i32_0 : i32, i32
  }
  func.func @transform_5(%arg0: i32) -> (i32, i32) {
    %c0_i32 = arith.constant 0 : i32
    %c0_i32_0 = arith.constant 0 : i32
    %c0_i32_1 = arith.constant 0 : i32
    return %c0_i32, %c0_i32_0 : i32, i32
  }
  func.func @transform_6(%arg0: i32) -> (i32, i32) {
    %c0_i32 = arith.constant 0 : i32
    %c0_i32_0 = arith.constant 0 : i32
    %c0_i32_1 = arith.constant 0 : i32
    return %c0_i32, %c0_i32_0 : i32, i32
  }
  func.func @transform_7(%arg0: i32) -> (i32, i32) {
    %c0_i32 = arith.constant 0 : i32
    %c0_i32_0 = arith.constant 0 : i32
    %c0_i32_1 = arith.constant 0 : i32
    return %c0_i32, %c0_i32_0 : i32, i32
  }
  func.func @transform_8(%arg0: i32) -> (i32, i32) {
    %c0_i32 = arith.constant 0 : i32
    %c0_i32_0 = arith.constant 0 : i32
    return %arg0, %c0_i32 : i32, i32
  }
}

</mosaic_0001>

<llo_original>
// kernel: tpu_custom_call.1
$region0: #{tpu_custom_call.1}
  #allocation0 [shape = 'u32[]', space=smem, size = 0x4, offset = 0x4, fixed_abs, tag = 'smem constant byte address 0x4 - core index']
  #allocation1 [shape = 'u32[144,128]{1,0:T(1,128)}', space=vmem, size = 0x12000, scoped, tag = 'internal scratch']
  %s0 = inlined_call_operand.vmem [shape: f32[256,32], index: 0, kind: input, shape index: {}]
  %s1 = inlined_call_operand.vmem [shape: f32[32,64], index: 1, kind: input, shape index: {}]
  %s2 = inlined_call_operand.vmem [shape: f32[64,64], index: 2, kind: input, shape index: {}]
  %s3 = inlined_call_operand.vmem [shape: f32[64,128], index: 3, kind: input, shape index: {}]
  %s4 = inlined_call_operand.vmem [shape: f32[32,128], index: 4, kind: input, shape index: {}]
  %s5 = inlined_call_operand.vmem [shape: f32[1,64], index: 5, kind: input, shape index: {}]
  %s6 = inlined_call_operand.vmem [shape: f32[1,64], index: 6, kind: input, shape index: {}]
  %s7 = inlined_call_operand.vmem [shape: f32[1,128], index: 7, kind: input, shape index: {}]
  %s8 = inlined_call_operand.hbm [shape: f32[256,128], index: 8, kind: output, shape index: {}]
  %s9 = sld [smem:[#allocation0]]
  $region65: #{tpu_custom_call.1} parent=0
    _
  %s11 = ssub.s32 1, %s9
  %s12 = scalar_select 0, %s11, %s9
  $region1: #{tpu_custom_call.1} parent=0
    #allocation2 [shape = 'u8[131072]{0}', space=vmem, size = 0x20000, scoped, tag = 'output window, operand 0']
    #allocation3 [shape = 's32[2]{0}', space=sflag, size = 0x8, scoped, tag = 'scoped memory for tpu_custom_call.1']
    %13 = vsyncpa [#allocation3], 0
    %s14 = scalar_lea.sflag [#allocation3], 1
    %15 = vsyncpa %s14, 0
    loop: start=0, step=1, limit=4
    $region2: #{tpu_custom_call.1} parent=1 // loop_pre_header
      _
    $region3: #{tpu_custom_call.1} parent=1 // loop_header
      %s17 = sphi 0, %s21
      %p18 = scmp.ge.s32.totalorder %s17, 4
      %s27 = sphi 0, %s29
      %s30 = sphi 0, %s27
      %s31 = sphi 0, %s30
      %s47 = sphi 0, %s31
      %s51 = sphi 0, %s51
      %s53 = sphi 0, %s51
      %s54 = sphi 0, %s53
      %s68 = sphi 0, %s54
      %s72 = sphi 0, %s72
      %s74 = sphi 0, %s72
      %s75 = sphi 0, %s74
      %s89 = sphi 0, %s75
      %s93 = sphi 0, %s93
      %s95 = sphi 0, %s93
      %s96 = sphi 0, %s95
      %s110 = sphi 0, %s96
      %s114 = sphi 0, %s114
      %s116 = sphi 0, %s114
      %s117 = sphi 0, %s116
      %s131 = sphi 0, %s117
      %s135 = sphi 0, %s135
      %s137 = sphi 0, %s135
      %s138 = sphi 0, %s137
      %s152 = sphi 0, %s138
      %s156 = sphi 0, %s156
      %s158 = sphi 0, %s156
      %s159 = sphi 0, %s158
      %s173 = sphi 0, %s159
      %s177 = sphi 0, %s177
      %s179 = sphi 0, %s177
      %s180 = sphi 0, %s179
      %s194 = sphi 0, %s180
      %s200 = sphi 0, %s202
      %s203 = sphi 0, %s200
      %s204 = sphi 0, %s203
      %s220 = sphi 0, %s204
    $region4: #{tpu_custom_call.1} parent=1 // loop_header_branch
      %20 = sbr.rel (%p18) target = $region8
    $region5: #{tpu_custom_call.1} parent=1 // loop_body
      %s22 = ssub.s32 %s17, 1
      %s23 = ssub.s32 %s17, 2
      %s24 = sadd.s32 %s17, 1
      %s25 = ssub.s32 %s17, %s24
      %p26 = scmp.eq.s32.totalorder %s25, 0
      %s28 = sadd.s32 %s27, 1
      %s29 = scalar_select %p26, %s27, %s28
      %p32 = pneg %p26
      %p33 = scmp.eq.s32.totalorder %s17, 1
      %p34 = por %p32, %p33
      %p35 = scmp.ne.s32.totalorder %s27, %s30
      %p36 = scmp.eq.s32.totalorder %s17, 0
      %p37 = por %p35, %p36
      %p38 = scmp.ne.s32.totalorder %s27, %s30
      %p39 = scmp.eq.s32.totalorder %s22, 1
      %p40 = por %p38, %p39
      %p41 = scmp.ne.s32.totalorder %s30, %s31
      %p42 = scmp.eq.s32.totalorder %s22, 0
      %p43 = por %p41, %p42
      %p44 = scmp.ne.s32.totalorder %s30, %s31
      %p45 = scmp.eq.s32.totalorder %s23, 1
      %p46 = por %p44, %p45
      %p48 = scmp.ne.s32.totalorder %s31, %s47
      %p49 = scmp.eq.s32.totalorder %s23, 0
      %p50 = por %p48, %p49
      %s52 = sadd.s32 %s51, 1
      %p55 = scmp.eq.s32.totalorder %s17, 1
      %p56 = scmp.ne.s32.totalorder %s51, %s53
      %p57 = scmp.eq.s32.totalorder %s17, 0
      %p58 = por %p56, %p57
      %p59 = scmp.ne.s32.totalorder %s51, %s53
      %p60 = scmp.eq.s32.totalorder %s22, 1
      %p61 = por %p59, %p60
      %p62 = scmp.ne.s32.totalorder %s53, %s54
      %p63 = scmp.eq.s32.totalorder %s22, 0
      %p64 = por %p62, %p63
      %p65 = scmp.ne.s32.totalorder %s53, %s54
      %p66 = scmp.eq.s32.totalorder %s23, 1
      %p67 = por %p65, %p66
      %p69 = scmp.ne.s32.totalorder %s54, %s68
      %p70 = scmp.eq.s32.totalorder %s23, 0
      %p71 = por %p69, %p70
      %s73 = sadd.s32 %s72, 1
      %p76 = scmp.eq.s32.totalorder %s17, 1
      %p77 = scmp.ne.s32.totalorder %s72, %s74
      %p78 = scmp.eq.s32.totalorder %s17, 0
      %p79 = por %p77, %p78
      %p80 = scmp.ne.s32.totalorder %s72, %s74
      %p81 = scmp.eq.s32.totalorder %s22, 1
      %p82 = por %p80, %p81
      %p83 = scmp.ne.s32.totalorder %s74, %s75
      %p84 = scmp.eq.s32.totalorder %s22, 0
      %p85 = por %p83, %p84
      %p86 = scmp.ne.s32.totalorder %s74, %s75
      %p87 = scmp.eq.s32.totalorder %s23, 1
      %p88 = por %p86, %p87
      %p90 = scmp.ne.s32.totalorder %s75, %s89
      %p91 = scmp.eq.s32.totalorder %s23, 0
      %p92 = por %p90, %p91
      %s94 = sadd.s32 %s93, 1
      %p97 = scmp.eq.s32.totalorder %s17, 1
      %p98 = scmp.ne.s32.totalorder %s93, %s95
      %p99 = scmp.eq.s32.totalorder %s17, 0
      %p100 = por %p98, %p99
      %p101 = scmp.ne.s32.totalorder %s93, %s95
      %p102 = scmp.eq.s32.totalorder %s22, 1
      %p103 = por %p101, %p102
      %p104 = scmp.ne.s32.totalorder %s95, %s96
      %p105 = scmp.eq.s32.totalorder %s22, 0
      %p106 = por %p104, %p105
      %p107 = scmp.ne.s32.totalorder %s95, %s96
      %p108 = scmp.eq.s32.totalorder %s23, 1
      %p109 = por %p107, %p108
      %p111 = scmp.ne.s32.totalorder %s96, %s110
      %p112 = scmp.eq.s32.totalorder %s23, 0
      %p113 = por %p111, %p112
      %s115 = sadd.s32 %s114, 1
      %p118 = scmp.eq.s32.totalorder %s17, 1
      %p119 = scmp.ne.s32.totalorder %s114, %s116
      %p120 = scmp.eq.s32.totalorder %s17, 0
      %p121 = por %p119, %p120
      %p122 = scmp.ne.s32.totalorder %s114, %s116
      %p123 = scmp.eq.s32.totalorder %s22, 1
      %p124 = por %p122, %p123
      %p125 = scmp.ne.s32.totalorder %s116, %s117
      %p126 = scmp.eq.s32.totalorder %s22, 0
      %p127 = por %p125, %p126
      %p128 = scmp.ne.s32.totalorder %s116, %s117
      %p129 = scmp.eq.s32.totalorder %s23, 1
      %p130 = por %p128, %p129
      %p132 = scmp.ne.s32.totalorder %s117, %s131
      %p133 = scmp.eq.s32.totalorder %s23, 0
      %p134 = por %p132, %p133
      %s136 = sadd.s32 %s135, 1
      %p139 = scmp.eq.s32.totalorder %s17, 1
      %p140 = scmp.ne.s32.totalorder %s135, %s137
      %p141 = scmp.eq.s32.totalorder %s17, 0
      %p142 = por %p140, %p141
      %p143 = scmp.ne.s32.totalorder %s135, %s137
      %p144 = scmp.eq.s32.totalorder %s22, 1
      %p145 = por %p143, %p144
      %p146 = scmp.ne.s32.totalorder %s137, %s138
      %p147 = scmp.eq.s32.totalorder %s22, 0
      %p148 = por %p146, %p147
      %p149 = scmp.ne.s32.totalorder %s137, %s138
      %p150 = scmp.eq.s32.totalorder %s23, 1
      %p151 = por %p149, %p150
      %p153 = scmp.ne.s32.totalorder %s138, %s152
      %p154 = scmp.eq.s32.totalorder %s23, 0
      %p155 = por %p153, %p154
      %s157 = sadd.s32 %s156, 1
      %p160 = scmp.eq.s32.totalorder %s17, 1
      %p161 = scmp.ne.s32.totalorder %s156, %s158
      %p162 = scmp.eq.s32.totalorder %s17, 0
      %p163 = por %p161, %p162
      %p164 = scmp.ne.s32.totalorder %s156, %s158
      %p165 = scmp.eq.s32.totalorder %s22, 1
      %p166 = por %p164, %p165
      %p167 = scmp.ne.s32.totalorder %s158, %s159
      %p168 = scmp.eq.s32.totalorder %s22, 0
      %p169 = por %p167, %p168
      %p170 = scmp.ne.s32.totalorder %s158, %s159
      %p171 = scmp.eq.s32.totalorder %s23, 1
      %p172 = por %p170, %p171
      %p174 = scmp.ne.s32.totalorder %s159, %s173
      %p175 = scmp.eq.s32.totalorder %s23, 0
      %p176 = por %p174, %p175
      %s178 = sadd.s32 %s177, 1
      %p181 = scmp.eq.s32.totalorder %s17, 1
      %p182 = scmp.ne.s32.totalorder %s177, %s179
      %p183 = scmp.eq.s32.totalorder %s17, 0
      %p184 = por %p182, %p183
      %p185 = scmp.ne.s32.totalorder %s177, %s179
      %p186 = scmp.eq.s32.totalorder %s22, 1
      %p187 = por %p185, %p186
      %p188 = scmp.ne.s32.totalorder %s179, %s180
      %p189 = scmp.eq.s32.totalorder %s22, 0
      %p190 = por %p188, %p189
      %p191 = scmp.ne.s32.totalorder %s179, %s180
      %p192 = scmp.eq.s32.totalorder %s23, 1
      %p193 = por %p191, %p192
      %p195 = scmp.ne.s32.totalorder %s180, %s194
      %p196 = scmp.eq.s32.totalorder %s23, 0
      %p197 = por %p195, %p196
      %s198 = ssub.s32 %s17, %s24
      %p199 = scmp.eq.s32.totalorder %s198, 0
      %s201 = sadd.s32 %s200, 1
      %s202 = scalar_select %p199, %s200, %s201
      %p205 = pneg %p199
      %p206 = scmp.eq.s32.totalorder %s17, 1
      %p207 = por %p205, %p206
      %p208 = scmp.ne.s32.totalorder %s200, %s203
      %p209 = scmp.eq.s32.totalorder %s17, 0
      %p210 = por %p208, %p209
      %p211 = scmp.ne.s32.totalorder %s200, %s203
      %p212 = scmp.eq.s32.totalorder %s22, 1
      %p213 = por %p211, %p212
      %p214 = scmp.ne.s32.totalorder %s203, %s204
      %p215 = scmp.eq.s32.totalorder %s22, 0
      %p216 = por %p214, %p215
      %p217 = scmp.ne.s32.totalorder %s203, %s204
      %p218 = scmp.eq.s32.totalorder %s23, 1
      %p219 = por %p217, %p218
      %p221 = scmp.ne.s32.totalorder %s204, %s220
      %p222 = scmp.eq.s32.totalorder %s23, 0
      %p223 = por %p221, %p222
      %p224 = scmp.le.s32.totalorder 1, %s17
      %p225 = scmp.lt.s32.totalorder %s17, 3
      %p226 = pnand %p224, %p225
      %p227 = pneg %p226
      // Predicated region
      $region9: #{tpu_custom_call.1} parent=5 // pred_check
        _
      $region10: #{tpu_custom_call.1} parent=5 // pred_check_branch
        %229 = sbr.rel (%p226) target = $region12
      $region11: #{tpu_custom_call.1} parent=5 // pred_region
        %s230 = ssub.s32 %s17, 1
        // Predicated region
        $region13: #{tpu_custom_call.1} parent=11 // pred_check
          %p231 = pneg %p64
        $region14: #{tpu_custom_call.1} parent=11 // pred_check_branch
          %233 = sbr.rel (%p231) target = $region16
        $region15: #{tpu_custom_call.1} parent=11 // pred_region
          _
        $region16: #{tpu_custom_call.1} parent=11 // pred_fallthru
          _
        // Predicated region
        $region17: #{tpu_custom_call.1} parent=11 // pred_check
          %p234 = pneg %p85
        $region18: #{tpu_custom_call.1} parent=11 // pred_check_branch
          %236 = sbr.rel (%p234) target = $region20
        $region19: #{tpu_custom_call.1} parent=11 // pred_region
          _
        $region20: #{tpu_custom_call.1} parent=11 // pred_fallthru
          _
        // Predicated region
        $region21: #{tpu_custom_call.1} parent=11 // pred_check
          %p237 = pneg %p106
        $region22: #{tpu_custom_call.1} parent=11 // pred_check_branch
          %239 = sbr.rel (%p237) target = $region24
        $region23: #{tpu_custom_call.1} parent=11 // pred_region
          _
        $region24: #{tpu_custom_call.1} parent=11 // pred_fallthru
          _
        // Predicated region
        $region25: #{tpu_custom_call.1} parent=11 // pred_check
          %p240 = pneg %p127
        $region26: #{tpu_custom_call.1} parent=11 // pred_check_branch
          %242 = sbr.rel (%p240) target = $region28
        $region27: #{tpu_custom_call.1} parent=11 // pred_region
          _
        $region28: #{tpu_custom_call.1} parent=11 // pred_fallthru
          _
        // Predicated region
        $region29: #{tpu_custom_call.1} parent=11 // pred_check
          %p243 = pneg %p148
        $region30: #{tpu_custom_call.1} parent=11 // pred_check_branch
          %245 = sbr.rel (%p243) target = $region32
        $region31: #{tpu_custom_call.1} parent=11 // pred_region
          _
        $region32: #{tpu_custom_call.1} parent=11 // pred_fallthru
          _
        // Predicated region
        $region33: #{tpu_custom_call.1} parent=11 // pred_check
          %p246 = pneg %p169
        $region34: #{tpu_custom_call.1} parent=11 // pred_check_branch
          %248 = sbr.rel (%p246) target = $region36
        $region35: #{tpu_custom_call.1} parent=11 // pred_region
          _
        $region36: #{tpu_custom_call.1} parent=11 // pred_fallthru
          _
        // Predicated region
        $region37: #{tpu_custom_call.1} parent=11 // pred_check
          %p249 = pneg %p190
        $region38: #{tpu_custom_call.1} parent=11 // pred_check_branch
          %251 = sbr.rel (%p249) target = $region40
        $region39: #{tpu_custom_call.1} parent=11 // pred_region
          _
        $region40: #{tpu_custom_call.1} parent=11 // pred_fallthru
          _
      $region12: #{tpu_custom_call.1} parent=5 // pred_fallthru
        _
      %p252 = scmp.lt.s32.totalorder %s17, 2
      // Predicated region
      $region41: #{tpu_custom_call.1} parent=5 // pred_check
        %p253 = pneg %p252
      $region42: #{tpu_custom_call.1} parent=5 // pred_check_branch
        %255 = sbr.rel (%p253) target = $region44
      $region43: #{tpu_custom_call.1} parent=5 // pred_region
        // Predicated region
        $region45: #{tpu_custom_call.1} parent=43 // pred_check
          %p256 = pneg %p37
        $region46: #{tpu_custom_call.1} parent=43 // pred_check_branch
          %258 = sbr.rel (%p256) target = $region48
        $region47: #{tpu_custom_call.1} parent=43 // pred_region
          %s259 = smul.u32 16, %s17
          %p260 = scmp.lt.s32.totalorder %s259, 31
          %s261 = scalar_select %p260, %s259, 31
          %s262 = smul.addr %s261, 8
          %s263 = scalar_lea.vmem %s0, %s262
          %s264 = smul.u32 16, %s17
        $region48: #{tpu_custom_call.1} parent=43 // pred_fallthru
          _
      $region44: #{tpu_custom_call.1} parent=5 // pred_fallthru
        _
      %p265 = scmp.le.s32.totalorder 1, %s17
      %p266 = scmp.lt.s32.totalorder %s17, 3
      %p267 = pnand %p265, %p266
      %p268 = pneg %p267
      // Predicated region
      $region49: #{tpu_custom_call.1} parent=5 // pred_check
        _
      $region50: #{tpu_custom_call.1} parent=5 // pred_check_branch
        %270 = sbr.rel (%p267) target = $region52
      $region51: #{tpu_custom_call.1} parent=5 // pred_region
        %s271 = ssub.s32 %s17, 1
        %s272 = smul.u32 16, %s22
        %p273 = scmp.lt.s32.totalorder %s272, 31
        %s274 = scalar_select %p273, %s272, 31
        %s275 = smul.addr %s274, 8
        %s276 = scalar_lea.vmem %s0, %s275
        %p277 = pneg %p43
        %p278 = pneg %p40
        %p279 = pneg %p64
        %p280 = pneg %p61
        %p281 = pneg %p85
        %p282 = pneg %p82
        %p283 = pneg %p106
        %p284 = pneg %p103
        %p285 = pneg %p127
        %p286 = pneg %p124
        %p287 = pneg %p148
        %p288 = pneg %p145
        %p289 = pneg %p169
        %p290 = pneg %p166
        %p291 = pneg %p190
        %p292 = pneg %p187
        %p293 = pneg %p216
        %p294 = pneg %p213
        %s295 = sand.u32 %s203, 1
        %s296 = scalar_lea.sflag [#allocation3], %s295
        %s297 = sand.u32 %s203, 1
        %s298 = smul.addr %s297, 128
        %s299 = scalar_lea.vmem [#allocation2], %s298
        %s300 = smul.u32 16, %s22
        %p301 = scmp.lt.s32.totalorder %s300, 31
        %s302 = scalar_select %p301, %s300, 31
        %s303 = smul.addr %s302, 8
        %s304 = scalar_lea.vmem %s0, %s303
        %s305 = smul.u32 16, %s22
        %s306 = smul.u32 16, %s22
        %v307 = vld [vmem:[%s304] sm:$0xff]
        %v308 = vld [vmem:[%s304 + $0x8] sm:$0xff]
        %v309 = vld [vmem:[%s304 + $0x10] sm:$0xff]
        %v310 = vld [vmem:[%s304 + $0x18] sm:$0xff]
        %v311 = vld [vmem:[%s304 + $0x20] sm:$0xff]
        %v312 = vld [vmem:[%s304 + $0x28] sm:$0xff]
        %v313 = vld [vmem:[%s304 + $0x30] sm:$0xff]
        %v314 = vld [vmem:[%s304 + $0x38] sm:$0xff]
        %v315 = vld [vmem:[%s304 + $0x40] sm:$0xff]
        %v316 = vld [vmem:[%s304 + $0x48] sm:$0xff]
        %v317 = vld [vmem:[%s304 + $0x50] sm:$0xff]
        %v318 = vld [vmem:[%s304 + $0x58] sm:$0xff]
        %v319 = vld [vmem:[%s304 + $0x60] sm:$0xff]
        %v320 = vld [vmem:[%s304 + $0x68] sm:$0xff]
        %v321 = vld [vmem:[%s304 + $0x70] sm:$0xff]
        %v322 = vld [vmem:[%s304 + $0x78] sm:$0xff]
        %v323 = vld [vmem:[%s1] sm:$0xff]
        %v324 = vld [vmem:[%s1 + $0x8] sm:$0xff]
        %v325 = vld [vmem:[%s1 + $0x10] sm:$0xff]
        %v326 = vld [vmem:[%s1 + $0x18] sm:$0xff]
        %v327 = vld [vmem:[%s5] sm:$0x1]
        %v329 = vlaneseq
        %v330 = vshrl.u32 %v329, 7
        %v331 = vsub.s32 0, %v330
        %v332 = vrot.slane %v327, %v331
        %vm334 = vcmask 261120
        %v336 = vsel %vm334, %v307, 0
        %v339 = vsel %vm334, %v308, 0
        %v342 = vsel %vm334, %v309, 0
        %v345 = vsel %vm334, %v310, 0
        %v348 = vsel %vm334, %v311, 0
        %v351 = vsel %vm334, %v312, 0
        %v354 = vsel %vm334, %v313, 0
        %v357 = vsel %vm334, %v314, 0
        %v360 = vsel %vm334, %v315, 0
        %v363 = vsel %vm334, %v316, 0
        %v366 = vsel %vm334, %v317, 0
        %v369 = vsel %vm334, %v318, 0
        %v372 = vsel %vm334, %v319, 0
        %v375 = vsel %vm334, %v320, 0
        %v378 = vsel %vm334, %v321, 0
        %v381 = vsel %vm334, %v322, 0
        %383 = vmatprep.subr.mxu0 0.0
        %384 = vmatpush1.msra.mxu0 0.0
        %385 = vmatprep.subr.mxu0 0.0
        %386 = vmatpush1.msra.mxu0 0.0
        %387 = vmatprep.subr.mxu0 0.0
        %388 = vmatpush1.msra.mxu0 0.0
        %389 = vmatprep.subr.mxu0 0.0
        %390 = vmatpush1.msra.mxu0 0.0
        %391 = vmatprep.subr.mxu0 0.0
        %392 = vmatpush1.msra.mxu0 0.0
        %393 = vmatprep.subr.mxu0 0.0
        %394 = vmatpush1.msra.mxu0 0.0
        %395 = vmatprep.subr.mxu0 0.0
        %396 = vmatpush1.msra.mxu0 0.0
        %397 = vmatprep.subr.mxu0 0.0
        %398 = vmatpush1.msra.mxu0 0.0
        %399 = vmatprep.subr.mxu0 0.0
        %400 = vmatpush1.msra.mxu0 0.0
        %401 = vmatprep.subr.mxu0 0.0
        %402 = vmatpush1.msra.mxu0 0.0
        %403 = vmatprep.subr.mxu0 0.0
        %404 = vmatpush1.msra.mxu0 0.0
        %405 = vmatprep.subr.mxu0 0.0
        %406 = vmatpush1.msra.mxu0 0.0
        %407 = vmatprep.subr.mxu0 0.0
        %408 = vmatpush1.msra.mxu0 %v326
        %409 = vmatprep.subr.mxu0 0.0
        %410 = vmatpush1.msra.mxu0 %v325
        %411 = vmatprep.subr.mxu0 0.0
        %412 = vmatpush1.msra.mxu0 %v324
        %413 = vmatprep.subr.mxu0 0.0
        %414 = vmatpush1.msra.mxu0 %v323
        %415 = vmatprep.subr.mxu0 0.0
        %416 = vmatpush2.msra.mxu0 0.0
        %417 = vmatprep.subr.mxu0 0.0
        %418 = vmatpush2.msra.mxu0 0.0
        %419 = vmatprep.subr.mxu0 0.0
        %420 = vmatpush2.msra.mxu0 0.0
        %421 = vmatprep.subr.mxu0 0.0
        %422 = vmatpush2.msra.mxu0 0.0
        %423 = vmatprep.subr.mxu0 0.0
        %424 = vmatpush2.msra.mxu0 0.0
        %425 = vmatprep.subr.mxu0 0.0
        %426 = vmatpush2.msra.mxu0 0.0
        %427 = vmatprep.subr.mxu0 0.0
        %428 = vmatpush2.msra.mxu0 0.0
        %429 = vmatprep.subr.mxu0 0.0
        %430 = vmatpush2.msra.mxu0 0.0
        %431 = vmatprep.subr.mxu0 0.0
        %432 = vmatpush2.msra.mxu0 0.0
        %433 = vmatprep.subr.mxu0 0.0
        %434 = vmatpush2.msra.mxu0 0.0
        %435 = vmatprep.subr.mxu0 0.0
        %436 = vmatpush2.msra.mxu0 0.0
        %437 = vmatprep.subr.mxu0 0.0
        %438 = vmatpush2.msra.mxu0 0.0
        %439 = vmatprep.subr.mxu0 0.0
        %440 = vmatpush2.msra.mxu0 0.0
        %441 = vmatprep.subr.mxu0 0.0
        %442 = vmatpush2.msra.mxu0 0.0
        %443 = vmatprep.subr.mxu0 0.0
        %444 = vmatpush2.msra.mxu0 0.0
        %445 = vmatprep.subr.mxu0 0.0
        %446 = vmatpush2.msra.mxu0 0.0
        %447 = vmatprep.mubr.f32.mxu0 0.0
        %448 = vmatmul.mubr.f32.gmra.mxu0 %v336
        %v449 = vpop.f32.mrf.mxu0
        %v450 = vadd.f32 %v332, %v449
        %v451 = vpop.f32.mrf.mxu0
        %452 = vmatprep.mubr.f32.mxu0 0.0
        %453 = vmatmul.mubr.f32.gmra.mxu0 %v339
        %v454 = vpop.f32.mrf.mxu0
        %v455 = vadd.f32 %v332, %v454
        %v456 = vpop.f32.mrf.mxu0
        %457 = vmatprep.mubr.f32.mxu0 0.0
        %458 = vmatmul.mubr.f32.gmra.mxu0 %v342
        %v459 = vpop.f32.mrf.mxu0
        %v460 = vadd.f32 %v332, %v459
        %v461 = vpop.f32.mrf.mxu0
        %462 = vmatprep.mubr.f32.mxu0 0.0
        %463 = vmatmul.mubr.f32.gmra.mxu0 %v345
        %v464 = vpop.f32.mrf.mxu0
        %v465 = vadd.f32 %v332, %v464
        %v466 = vpop.f32.mrf.mxu0
        %467 = vmatprep.mubr.f32.mxu0 0.0
        %468 = vmatmul.mubr.f32.gmra.mxu0 %v348
        %v469 = vpop.f32.mrf.mxu0
        %v470 = vadd.f32 %v332, %v469
        %v471 = vpop.f32.mrf.mxu0
        %472 = vmatprep.mubr.f32.mxu0 0.0
        %473 = vmatmul.mubr.f32.gmra.mxu0 %v351
        %v474 = vpop.f32.mrf.mxu0
        %v475 = vadd.f32 %v332, %v474
        %v476 = vpop.f32.mrf.mxu0
        %477 = vmatprep.mubr.f32.mxu0 0.0
        %478 = vmatmul.mubr.f32.gmra.mxu0 %v354
        %v479 = vpop.f32.mrf.mxu0
        %v480 = vadd.f32 %v332, %v479
        %v481 = vpop.f32.mrf.mxu0
        %482 = vmatprep.mubr.f32.mxu0 0.0
        %483 = vmatmul.mubr.f32.gmra.mxu0 %v357
        %v484 = vpop.f32.mrf.mxu0
        %v485 = vadd.f32 %v332, %v484
        %v486 = vpop.f32.mrf.mxu0
        %487 = vmatprep.mubr.f32.mxu0 0.0
        %488 = vmatmul.mubr.f32.gmra.mxu0 %v360
        %v489 = vpop.f32.mrf.mxu0
        %v490 = vadd.f32 %v332, %v489
        %v491 = vpop.f32.mrf.mxu0
        %492 = vmatprep.mubr.f32.mxu0 0.0
        %493 = vmatmul.mubr.f32.gmra.mxu0 %v363
        %v494 = vpop.f32.mrf.mxu0
        %v495 = vadd.f32 %v332, %v494
        %v496 = vpop.f32.mrf.mxu0
        %497 = vmatprep.mubr.f32.mxu0 0.0
        %498 = vmatmul.mubr.f32.gmra.mxu0 %v366
        %v499 = vpop.f32.mrf.mxu0
        %v500 = vadd.f32 %v332, %v499
        %v501 = vpop.f32.mrf.mxu0
        %502 = vmatprep.mubr.f32.mxu0 0.0
        %503 = vmatmul.mubr.f32.gmra.mxu0 %v369
        %v504 = vpop.f32.mrf.mxu0
        %v505 = vadd.f32 %v332, %v504
        %v506 = vpop.f32.mrf.mxu0
        %507 = vmatprep.mubr.f32.mxu0 0.0
        %508 = vmatmul.mubr.f32.gmra.mxu0 %v372
        %v509 = vpop.f32.mrf.mxu0
        %v510 = vadd.f32 %v332, %v509
        %v511 = vpop.f32.mrf.mxu0
        %512 = vmatprep.mubr.f32.mxu0 0.0
        %513 = vmatmul.mubr.f32.gmra.mxu0 %v375
        %v514 = vpop.f32.mrf.mxu0
        %v515 = vadd.f32 %v332, %v514
        %v516 = vpop.f32.mrf.mxu0
        %517 = vmatprep.mubr.f32.mxu0 0.0
        %518 = vmatmul.mubr.f32.gmra.mxu0 %v378
        %v519 = vpop.f32.mrf.mxu0
        %v520 = vadd.f32 %v332, %v519
        %v521 = vpop.f32.mrf.mxu0
        %522 = vmatprep.mubr.f32.mxu0 0.0
        %523 = vmatmul.mubr.f32.gmra.mxu0 %v381
        %v524 = vpop.f32.mrf.mxu0
        %v525 = vadd.f32 %v332, %v524
        %v526 = vpop.f32.mrf.mxu0
        %527 = vdwg.mxu0
        %v528 = vmax.f32 %v450, 0.0
        %v529 = vmax.f32 %v455, 0.0
        %v530 = vmax.f32 %v460, 0.0
        %v531 = vmax.f32 %v465, 0.0
        %v532 = vmax.f32 %v470, 0.0
        %v533 = vmax.f32 %v475, 0.0
        %v534 = vmax.f32 %v480, 0.0
        %v535 = vmax.f32 %v485, 0.0
        %v536 = vmax.f32 %v490, 0.0
        %v537 = vmax.f32 %v495, 0.0
        %v538 = vmax.f32 %v500, 0.0
        %v539 = vmax.f32 %v505, 0.0
        %v540 = vmax.f32 %v510, 0.0
        %v541 = vmax.f32 %v515, 0.0
        %v542 = vmax.f32 %v520, 0.0
        %v543 = vmax.f32 %v525, 0.0
        %v544 = vld [vmem:[%s2] sm:$0xff]
        %v545 = vld [vmem:[%s2 + $0x8] sm:$0xff]
        %v546 = vld [vmem:[%s2 + $0x10] sm:$0xff]
        %v547 = vld [vmem:[%s2 + $0x18] sm:$0xff]
        %v548 = vld [vmem:[%s2 + $0x20] sm:$0xff]
        %v549 = vld [vmem:[%s2 + $0x28] sm:$0xff]
        %v550 = vld [vmem:[%s2 + $0x30] sm:$0xff]
        %v551 = vld [vmem:[%s2 + $0x38] sm:$0xff]
        %v552 = vld [vmem:[%s6] sm:$0x1]
        %v554 = vlaneseq
        %v555 = vshrl.u32 %v554, 7
        %v556 = vsub.s32 0, %v555
        %v557 = vrot.slane %v552, %v556
        %vm559 = vcmask 523264
        %v561 = vsel %vm559, %v528, 0
        %v564 = vsel %vm559, %v529, 0
        %v567 = vsel %vm559, %v530, 0
        %v570 = vsel %vm559, %v531, 0
        %v573 = vsel %vm559, %v532, 0
        %v576 = vsel %vm559, %v533, 0
        %v579 = vsel %vm559, %v534, 0
        %v582 = vsel %vm559, %v535, 0
        %v585 = vsel %vm559, %v536, 0
        %v588 = vsel %vm559, %v537, 0
        %v591 = vsel %vm559, %v538, 0
        %v594 = vsel %vm559, %v539, 0
        %v597 = vsel %vm559, %v540, 0
        %v600 = vsel %vm559, %v541, 0
        %v603 = vsel %vm559, %v542, 0
        %v606 = vsel %vm559, %v543, 0
        %608 = vmatprep.subr.mxu0 0.0
        %609 = vmatpush1.msra.mxu0 0.0
        %610 = vmatprep.subr.mxu0 0.0
        %611 = vmatpush1.msra.mxu0 0.0
        %612 = vmatprep.subr.mxu0 0.0
        %613 = vmatpush1.msra.mxu0 0.0
        %614 = vmatprep.subr.mxu0 0.0
        %615 = vmatpush1.msra.mxu0 0.0
        %616 = vmatprep.subr.mxu0 0.0
        %617 = vmatpush1.msra.mxu0 0.0
        %618 = vmatprep.subr.mxu0 0.0
        %619 = vmatpush1.msra.mxu0 0.0
        %620 = vmatprep.subr.mxu0 0.0
        %621 = vmatpush1.msra.mxu0 0.0
        %622 = vmatprep.subr.mxu0 0.0
        %623 = vmatpush1.msra.mxu0 0.0
        %624 = vmatprep.subr.mxu0 0.0
        %625 = vmatpush1.msra.mxu0 %v551
        %626 = vmatprep.subr.mxu0 0.0
        %627 = vmatpush1.msra.mxu0 %v550
        %628 = vmatprep.subr.mxu0 0.0
        %629 = vmatpush1.msra.mxu0 %v549
        %630 = vmatprep.subr.mxu0 0.0
        %631 = vmatpush1.msra.mxu0 %v548
        %632 = vmatprep.subr.mxu0 0.0
        %633 = vmatpush1.msra.mxu0 %v547
        %634 = vmatprep.subr.mxu0 0.0
        %635 = vmatpush1.msra.mxu0 %v546
        %636 = vmatprep.subr.mxu0 0.0
        %637 = vmatpush1.msra.mxu0 %v545
        %638 = vmatprep.subr.mxu0 0.0
        %639 = vmatpush1.msra.mxu0 %v544
        %640 = vmatprep.subr.mxu0 0.0
        %641 = vmatpush2.msra.mxu0 0.0
        %642 = vmatprep.subr.mxu0 0.0
        %643 = vmatpush2.msra.mxu0 0.0
        %644 = vmatprep.subr.mxu0 0.0
        %645 = vmatpush2.msra.mxu0 0.0
        %646 = vmatprep.subr.mxu0 0.0
        %647 = vmatpush2.msra.mxu0 0.0
        %648 = vmatprep.subr.mxu0 0.0
        %649 = vmatpush2.msra.mxu0 0.0
        %650 = vmatprep.subr.mxu0 0.0
        %651 = vmatpush2.msra.mxu0 0.0
        %652 = vmatprep.subr.mxu0 0.0
        %653 = vmatpush2.msra.mxu0 0.0
        %654 = vmatprep.subr.mxu0 0.0
        %655 = vmatpush2.msra.mxu0 0.0
        %656 = vmatprep.subr.mxu0 0.0
        %657 = vmatpush2.msra.mxu0 0.0
        %658 = vmatprep.subr.mxu0 0.0
        %659 = vmatpush2.msra.mxu0 0.0
        %660 = vmatprep.subr.mxu0 0.0
        %661 = vmatpush2.msra.mxu0 0.0
        %662 = vmatprep.subr.mxu0 0.0
        %663 = vmatpush2.msra.mxu0 0.0
        %664 = vmatprep.subr.mxu0 0.0
        %665 = vmatpush2.msra.mxu0 0.0
        %666 = vmatprep.subr.mxu0 0.0
        %667 = vmatpush2.msra.mxu0 0.0
        %668 = vmatprep.subr.mxu0 0.0
        %669 = vmatpush2.msra.mxu0 0.0
        %670 = vmatprep.subr.mxu0 0.0
        %671 = vmatpush2.msra.mxu0 0.0
        %672 = vmatprep.mubr.f32.mxu0 0.0
        %673 = vmatmul.mubr.f32.gmra.mxu0 %v561
        %v674 = vpop.f32.mrf.mxu0
        %v675 = vadd.f32 %v557, %v674
        %v676 = vpop.f32.mrf.mxu0
        %677 = vmatprep.mubr.f32.mxu0 0.0
        %678 = vmatmul.mubr.f32.gmra.mxu0 %v564
        %v679 = vpop.f32.mrf.mxu0
        %v680 = vadd.f32 %v557, %v679
        %v681 = vpop.f32.mrf.mxu0
        %682 = vmatprep.mubr.f32.mxu0 0.0
        %683 = vmatmul.mubr.f32.gmra.mxu0 %v567
        %v684 = vpop.f32.mrf.mxu0
        %v685 = vadd.f32 %v557, %v684
        %v686 = vpop.f32.mrf.mxu0
        %687 = vmatprep.mubr.f32.mxu0 0.0
        %688 = vmatmul.mubr.f32.gmra.mxu0 %v570
        %v689 = vpop.f32.mrf.mxu0
        %v690 = vadd.f32 %v557, %v689
        %v691 = vpop.f32.mrf.mxu0
        %692 = vmatprep.mubr.f32.mxu0 0.0
        %693 = vmatmul.mubr.f32.gmra.mxu0 %v573
        %v694 = vpop.f32.mrf.mxu0
        %v695 = vadd.f32 %v557, %v694
        %v696 = vpop.f32.mrf.mxu0
        %697 = vmatprep.mubr.f32.mxu0 0.0
        %698 = vmatmul.mubr.f32.gmra.mxu0 %v576
        %v699 = vpop.f32.mrf.mxu0
        %v700 = vadd.f32 %v557, %v699
        %v701 = vpop.f32.mrf.mxu0
        %702 = vmatprep.mubr.f32.mxu0 0.0
        %703 = vmatmul.mubr.f32.gmra.mxu0 %v579
        %v704 = vpop.f32.mrf.mxu0
        %v705 = vadd.f32 %v557, %v704
        %v706 = vpop.f32.mrf.mxu0
        %707 = vmatprep.mubr.f32.mxu0 0.0
        %708 = vmatmul.mubr.f32.gmra.mxu0 %v582
        %v709 = vpop.f32.mrf.mxu0
        %v710 = vadd.f32 %v557, %v709
        %v711 = vpop.f32.mrf.mxu0
        %712 = vmatprep.mubr.f32.mxu0 0.0
        %713 = vmatmul.mubr.f32.gmra.mxu0 %v585
        %v714 = vpop.f32.mrf.mxu0
        %v715 = vadd.f32 %v557, %v714
        %v716 = vpop.f32.mrf.mxu0
        %717 = vmatprep.mubr.f32.mxu0 0.0
        %718 = vmatmul.mubr.f32.gmra.mxu0 %v588
        %v719 = vpop.f32.mrf.mxu0
        %v720 = vadd.f32 %v557, %v719
        %v721 = vpop.f32.mrf.mxu0
        %722 = vmatprep.mubr.f32.mxu0 0.0
        %723 = vmatmul.mubr.f32.gmra.mxu0 %v591
        %v724 = vpop.f32.mrf.mxu0
        %v725 = vadd.f32 %v557, %v724
        %v726 = vpop.f32.mrf.mxu0
        %727 = vmatprep.mubr.f32.mxu0 0.0
        %728 = vmatmul.mubr.f32.gmra.mxu0 %v594
        %v729 = vpop.f32.mrf.mxu0
        %v730 = vadd.f32 %v557, %v729
        %v731 = vpop.f32.mrf.mxu0
        %732 = vmatprep.mubr.f32.mxu0 0.0
        %733 = vmatmul.mubr.f32.gmra.mxu0 %v597
        %v734 = vpop.f32.mrf.mxu0
        %v735 = vadd.f32 %v557, %v734
        %v736 = vpop.f32.mrf.mxu0
        %737 = vmatprep.mubr.f32.mxu0 0.0
        %738 = vmatmul.mubr.f32.gmra.mxu0 %v600
        %v739 = vpop.f32.mrf.mxu0
        %v740 = vadd.f32 %v557, %v739
        %v741 = vpop.f32.mrf.mxu0
        %742 = vmatprep.mubr.f32.mxu0 0.0
        %743 = vmatmul.mubr.f32.gmra.mxu0 %v603
        %v744 = vpop.f32.mrf.mxu0
        %v745 = vadd.f32 %v557, %v744
        %v746 = vpop.f32.mrf.mxu0
        %747 = vmatprep.mubr.f32.mxu0 0.0
        %748 = vmatmul.mubr.f32.gmra.mxu0 %v606
        %v749 = vpop.f32.mrf.mxu0
        %v750 = vadd.f32 %v557, %v749
        %v751 = vpop.f32.mrf.mxu0
        %752 = vdwg.mxu0
        %v753 = vmax.f32 %v675, 0.0
        %v754 = vmax.f32 %v680, 0.0
        %v755 = vmax.f32 %v685, 0.0
        %v756 = vmax.f32 %v690, 0.0
        %v757 = vmax.f32 %v695, 0.0
        %v758 = vmax.f32 %v700, 0.0
        %v759 = vmax.f32 %v705, 0.0
        %v760 = vmax.f32 %v710, 0.0
        %v761 = vmax.f32 %v715, 0.0
        %v762 = vmax.f32 %v720, 0.0
        %v763 = vmax.f32 %v725, 0.0
        %v764 = vmax.f32 %v730, 0.0
        %v765 = vmax.f32 %v735, 0.0
        %v766 = vmax.f32 %v740, 0.0
        %v767 = vmax.f32 %v745, 0.0
        %v768 = vmax.f32 %v750, 0.0
        %v769 = vld [vmem:[%s3] sm:$0xff]
        %v770 = vld [vmem:[%s3 + $0x8] sm:$0xff]
        %v771 = vld [vmem:[%s3 + $0x10] sm:$0xff]
        %v772 = vld [vmem:[%s3 + $0x18] sm:$0xff]
        %v773 = vld [vmem:[%s3 + $0x20] sm:$0xff]
        %v774 = vld [vmem:[%s3 + $0x28] sm:$0xff]
        %v775 = vld [vmem:[%s3 + $0x30] sm:$0xff]
        %v776 = vld [vmem:[%s3 + $0x38] sm:$0xff]
        %v777 = vld [vmem:[%s4] sm:$0xff]
        %v778 = vld [vmem:[%s4 + $0x8] sm:$0xff]
        %v779 = vld [vmem:[%s4 + $0x10] sm:$0xff]
        %v780 = vld [vmem:[%s4 + $0x18] sm:$0xff]
        %781 = vmatprep.subr.mxu0 0.0
        %782 = vmatpush1.msra.mxu0 0.0
        %783 = vmatprep.subr.mxu0 0.0
        %784 = vmatpush1.msra.mxu0 0.0
        %785 = vmatprep.subr.mxu0 0.0
        %786 = vmatpush1.msra.mxu0 0.0
        %787 = vmatprep.subr.mxu0 0.0
        %788 = vmatpush1.msra.mxu0 0.0
        %789 = vmatprep.subr.mxu0 0.0
        %790 = vmatpush1.msra.mxu0 0.0
        %791 = vmatprep.subr.mxu0 0.0
        %792 = vmatpush1.msra.mxu0 0.0
        %793 = vmatprep.subr.mxu0 0.0
        %794 = vmatpush1.msra.mxu0 0.0
        %795 = vmatprep.subr.mxu0 0.0
        %796 = vmatpush1.msra.mxu0 0.0
        %797 = vmatprep.subr.mxu0 0.0
        %798 = vmatpush1.msra.mxu0 0.0
        %799 = vmatprep.subr.mxu0 0.0
        %800 = vmatpush1.msra.mxu0 0.0
        %801 = vmatprep.subr.mxu0 0.0
        %802 = vmatpush1.msra.mxu0 0.0
        %803 = vmatprep.subr.mxu0 0.0
        %804 = vmatpush1.msra.mxu0 0.0
        %805 = vmatprep.subr.mxu0 0.0
        %806 = vmatpush1.msra.mxu0 %v780
        %807 = vmatprep.subr.mxu0 0.0
        %808 = vmatpush1.msra.mxu0 %v779
        %809 = vmatprep.subr.mxu0 0.0
        %810 = vmatpush1.msra.mxu0 %v778
        %811 = vmatprep.subr.mxu0 0.0
        %812 = vmatpush1.msra.mxu0 %v777
        %813 = vmatprep.subr.mxu0 0.0
        %814 = vmatpush2.msra.mxu0 0.0
        %815 = vmatprep.subr.mxu0 0.0
        %816 = vmatpush2.msra.mxu0 0.0
        %817 = vmatprep.subr.mxu0 0.0
        %818 = vmatpush2.msra.mxu0 0.0
        %819 = vmatprep.subr.mxu0 0.0
        %820 = vmatpush2.msra.mxu0 0.0
        %821 = vmatprep.subr.mxu0 0.0
        %822 = vmatpush2.msra.mxu0 0.0
        %823 = vmatprep.subr.mxu0 0.0
        %824 = vmatpush2.msra.mxu0 0.0
        %825 = vmatprep.subr.mxu0 0.0
        %826 = vmatpush2.msra.mxu0 0.0
        %827 = vmatprep.subr.mxu0 0.0
        %828 = vmatpush2.msra.mxu0 0.0
        %829 = vmatprep.subr.mxu0 0.0
        %830 = vmatpush2.msra.mxu0 0.0
        %831 = vmatprep.subr.mxu0 0.0
        %832 = vmatpush2.msra.mxu0 0.0
        %833 = vmatprep.subr.mxu0 0.0
        %834 = vmatpush2.msra.mxu0 0.0
        %835 = vmatprep.subr.mxu0 0.0
        %836 = vmatpush2.msra.mxu0 0.0
        %837 = vmatprep.subr.mxu0 0.0
        %838 = vmatpush2.msra.mxu0 0.0
        %839 = vmatprep.subr.mxu0 0.0
        %840 = vmatpush2.msra.mxu0 0.0
        %841 = vmatprep.subr.mxu0 0.0
        %842 = vmatpush2.msra.mxu0 0.0
        %843 = vmatprep.subr.mxu0 0.0
        %844 = vmatpush2.msra.mxu0 0.0
        %845 = vmatprep.mubr.f32.mxu0 0.0
        %846 = vmatmul.mubr.f32.gmra.mxu0 %v336
        %v847 = vpop.f32.mrf.mxu0
        %v848 = vadd.f32 0.0, %v847
        %v849 = vpop.f32.mrf.mxu0
        %850 = vmatprep.mubr.f32.mxu0 0.0
        %851 = vmatmul.mubr.f32.gmra.mxu0 %v339
        %v852 = vpop.f32.mrf.mxu0
        %v853 = vadd.f32 0.0, %v852
        %v854 = vpop.f32.mrf.mxu0
        %855 = vmatprep.mubr.f32.mxu0 0.0
        %856 = vmatmul.mubr.f32.gmra.mxu0 %v342
        %v857 = vpop.f32.mrf.mxu0
        %v858 = vadd.f32 0.0, %v857
        %v859 = vpop.f32.mrf.mxu0
        %860 = vmatprep.mubr.f32.mxu0 0.0
        %861 = vmatmul.mubr.f32.gmra.mxu0 %v345
        %v862 = vpop.f32.mrf.mxu0
        %v863 = vadd.f32 0.0, %v862
        %v864 = vpop.f32.mrf.mxu0
        %865 = vmatprep.mubr.f32.mxu0 0.0
        %866 = vmatmul.mubr.f32.gmra.mxu0 %v348
        %v867 = vpop.f32.mrf.mxu0
        %v868 = vadd.f32 0.0, %v867
        %v869 = vpop.f32.mrf.mxu0
        %870 = vmatprep.mubr.f32.mxu0 0.0
        %871 = vmatmul.mubr.f32.gmra.mxu0 %v351
        %v872 = vpop.f32.mrf.mxu0
        %v873 = vadd.f32 0.0, %v872
        %v874 = vpop.f32.mrf.mxu0
        %875 = vmatprep.mubr.f32.mxu0 0.0
        %876 = vmatmul.mubr.f32.gmra.mxu0 %v354
        %v877 = vpop.f32.mrf.mxu0
        %v878 = vadd.f32 0.0, %v877
        %v879 = vpop.f32.mrf.mxu0
        %880 = vmatprep.mubr.f32.mxu0 0.0
        %881 = vmatmul.mubr.f32.gmra.mxu0 %v357
        %v882 = vpop.f32.mrf.mxu0
        %v883 = vadd.f32 0.0, %v882
        %v884 = vpop.f32.mrf.mxu0
        %885 = vmatprep.mubr.f32.mxu0 0.0
        %886 = vmatmul.mubr.f32.gmra.mxu0 %v360
        %v887 = vpop.f32.mrf.mxu0
        %v888 = vadd.f32 0.0, %v887
        %v889 = vpop.f32.mrf.mxu0
        %890 = vmatprep.mubr.f32.mxu0 0.0
        %891 = vmatmul.mubr.f32.gmra.mxu0 %v363
        %v892 = vpop.f32.mrf.mxu0
        %v893 = vadd.f32 0.0, %v892
        %v894 = vpop.f32.mrf.mxu0
        %895 = vmatprep.mubr.f32.mxu0 0.0
        %896 = vmatmul.mubr.f32.gmra.mxu0 %v366
        %v897 = vpop.f32.mrf.mxu0
        %v898 = vadd.f32 0.0, %v897
        %v899 = vpop.f32.mrf.mxu0
        %900 = vmatprep.mubr.f32.mxu0 0.0
        %901 = vmatmul.mubr.f32.gmra.mxu0 %v369
        %v902 = vpop.f32.mrf.mxu0
        %v903 = vadd.f32 0.0, %v902
        %v904 = vpop.f32.mrf.mxu0
        %905 = vmatprep.mubr.f32.mxu0 0.0
        %906 = vmatmul.mubr.f32.gmra.mxu0 %v372
        %v907 = vpop.f32.mrf.mxu0
        %v908 = vadd.f32 0.0, %v907
        %v909 = vpop.f32.mrf.mxu0
        %910 = vmatprep.mubr.f32.mxu0 0.0
        %911 = vmatmul.mubr.f32.gmra.mxu0 %v375
        %v912 = vpop.f32.mrf.mxu0
        %v913 = vadd.f32 0.0, %v912
        %v914 = vpop.f32.mrf.mxu0
        %915 = vmatprep.mubr.f32.mxu0 0.0
        %916 = vmatmul.mubr.f32.gmra.mxu0 %v378
        %v917 = vpop.f32.mrf.mxu0
        %v918 = vadd.f32 0.0, %v917
        %v919 = vpop.f32.mrf.mxu0
        %920 = vmatprep.mubr.f32.mxu0 0.0
        %921 = vmatmul.mubr.f32.gmra.mxu0 %v381
        %v922 = vpop.f32.mrf.mxu0
        %v923 = vadd.f32 0.0, %v922
        %v924 = vpop.f32.mrf.mxu0
        %925 = vdwg.mxu0
        %v927 = vsel %vm559, %v753, 0
        %v930 = vsel %vm559, %v754, 0
        %v933 = vsel %vm559, %v755, 0
        %v936 = vsel %vm559, %v756, 0
        %v939 = vsel %vm559, %v757, 0
        %v942 = vsel %vm559, %v758, 0
        %v945 = vsel %vm559, %v759, 0
        %v948 = vsel %vm559, %v760, 0
        %v951 = vsel %vm559, %v761, 0
        %v954 = vsel %vm559, %v762, 0
        %v957 = vsel %vm559, %v763, 0
        %v960 = vsel %vm559, %v764, 0
        %v963 = vsel %vm559, %v765, 0
        %v966 = vsel %vm559, %v766, 0
        %v969 = vsel %vm559, %v767, 0
        %v972 = vsel %vm559, %v768, 0
        %974 = vmatprep.subr.mxu0 0.0
        %975 = vmatpush1.msra.mxu0 0.0
        %976 = vmatprep.subr.mxu0 0.0
        %977 = vmatpush1.msra.mxu0 0.0
        %978 = vmatprep.subr.mxu0 0.0
        %979 = vmatpush1.msra.mxu0 0.0
        %980 = vmatprep.subr.mxu0 0.0
        %981 = vmatpush1.msra.mxu0 0.0
        %982 = vmatprep.subr.mxu0 0.0
        %983 = vmatpush1.msra.mxu0 0.0
        %984 = vmatprep.subr.mxu0 0.0
        %985 = vmatpush1.msra.mxu0 0.0
        %986 = vmatprep.subr.mxu0 0.0
        %987 = vmatpush1.msra.mxu0 0.0
        %988 = vmatprep.subr.mxu0 0.0
        %989 = vmatpush1.msra.mxu0 0.0
        %990 = vmatprep.subr.mxu0 0.0
        %991 = vmatpush1.msra.mxu0 %v776
        %992 = vmatprep.subr.mxu0 0.0
        %993 = vmatpush1.msra.mxu0 %v775
        %994 = vmatprep.subr.mxu0 0.0
        %995 = vmatpush1.msra.mxu0 %v774
        %996 = vmatprep.subr.mxu0 0.0
        %997 = vmatpush1.msra.mxu0 %v773
        %998 = vmatprep.subr.mxu0 0.0
        %999 = vmatpush1.msra.mxu0 %v772
        %1000 = vmatprep.subr.mxu0 0.0
        %1001 = vmatpush1.msra.mxu0 %v771
        %1002 = vmatprep.subr.mxu0 0.0
        %1003 = vmatpush1.msra.mxu0 %v770
        %1004 = vmatprep.subr.mxu0 0.0
        %1005 = vmatpush1.msra.mxu0 %v769
        %1006 = vmatprep.subr.mxu0 0.0
        %1007 = vmatpush2.msra.mxu0 0.0
        %1008 = vmatprep.subr.mxu0 0.0
        %1009 = vmatpush2.msra.mxu0 0.0
        %1010 = vmatprep.subr.mxu0 0.0
        %1011 = vmatpush2.msra.mxu0 0.0
        %1012 = vmatprep.subr.mxu0 0.0
        %1013 = vmatpush2.msra.mxu0 0.0
        %1014 = vmatprep.subr.mxu0 0.0
        %1015 = vmatpush2.msra.mxu0 0.0
        %1016 = vmatprep.subr.mxu0 0.0
        %1017 = vmatpush2.msra.mxu0 0.0
        %1018 = vmatprep.subr.mxu0 0.0
        %1019 = vmatpush2.msra.mxu0 0.0
        %1020 = vmatprep.subr.mxu0 0.0
        %1021 = vmatpush2.msra.mxu0 0.0
        %1022 = vmatprep.subr.mxu0 0.0
        %1023 = vmatpush2.msra.mxu0 0.0
        %1024 = vmatprep.subr.mxu0 0.0
        %1025 = vmatpush2.msra.mxu0 0.0
        %1026 = vmatprep.subr.mxu0 0.0
        %1027 = vmatpush2.msra.mxu0 0.0
        %1028 = vmatprep.subr.mxu0 0.0
        %1029 = vmatpush2.msra.mxu0 0.0
        %1030 = vmatprep.subr.mxu0 0.0
        %1031 = vmatpush2.msra.mxu0 0.0
        %1032 = vmatprep.subr.mxu0 0.0
        %1033 = vmatpush2.msra.mxu0 0.0
        %1034 = vmatprep.subr.mxu0 0.0
        %1035 = vmatpush2.msra.mxu0 0.0
        %1036 = vmatprep.subr.mxu0 0.0
        %1037 = vmatpush2.msra.mxu0 0.0
        %1038 = vmatprep.mubr.f32.mxu0 0.0
        %1039 = vmatmul.mubr.f32.gmra.mxu0 %v927
        %v1040 = vpop.f32.mrf.mxu0
        %v1041 = vadd.f32 %v848, %v1040
        %v1042 = vpop.f32.mrf.mxu0
        %1043 = vmatprep.mubr.f32.mxu0 0.0
        %1044 = vmatmul.mubr.f32.gmra.mxu0 %v930
        %v1045 = vpop.f32.mrf.mxu0
        %v1046 = vadd.f32 %v853, %v1045
        %v1047 = vpop.f32.mrf.mxu0
        %1048 = vmatprep.mubr.f32.mxu0 0.0
        %1049 = vmatmul.mubr.f32.gmra.mxu0 %v933
        %v1050 = vpop.f32.mrf.mxu0
        %v1051 = vadd.f32 %v858, %v1050
        %v1052 = vpop.f32.mrf.mxu0
        %1053 = vmatprep.mubr.f32.mxu0 0.0
        %1054 = vmatmul.mubr.f32.gmra.mxu0 %v936
        %v1055 = vpop.f32.mrf.mxu0
        %v1056 = vadd.f32 %v863, %v1055
        %v1057 = vpop.f32.mrf.mxu0
        %1058 = vmatprep.mubr.f32.mxu0 0.0
        %1059 = vmatmul.mubr.f32.gmra.mxu0 %v939
        %v1060 = vpop.f32.mrf.mxu0
        %v1061 = vadd.f32 %v868, %v1060
        %v1062 = vpop.f32.mrf.mxu0
        %1063 = vmatprep.mubr.f32.mxu0 0.0
        %1064 = vmatmul.mubr.f32.gmra.mxu0 %v942
        %v1065 = vpop.f32.mrf.mxu0
        %v1066 = vadd.f32 %v873, %v1065
        %v1067 = vpop.f32.mrf.mxu0
        %1068 = vmatprep.mubr.f32.mxu0 0.0
        %1069 = vmatmul.mubr.f32.gmra.mxu0 %v945
        %v1070 = vpop.f32.mrf.mxu0
        %v1071 = vadd.f32 %v878, %v1070
        %v1072 = vpop.f32.mrf.mxu0
        %1073 = vmatprep.mubr.f32.mxu0 0.0
        %1074 = vmatmul.mubr.f32.gmra.mxu0 %v948
        %v1075 = vpop.f32.mrf.mxu0
        %v1076 = vadd.f32 %v883, %v1075
        %v1077 = vpop.f32.mrf.mxu0
        %1078 = vmatprep.mubr.f32.mxu0 0.0
        %1079 = vmatmul.mubr.f32.gmra.mxu0 %v951
        %v1080 = vpop.f32.mrf.mxu0
        %v1081 = vadd.f32 %v888, %v1080
        %v1082 = vpop.f32.mrf.mxu0
        %1083 = vmatprep.mubr.f32.mxu0 0.0
        %1084 = vmatmul.mubr.f32.gmra.mxu0 %v954
        %v1085 = vpop.f32.mrf.mxu0
        %v1086 = vadd.f32 %v893, %v1085
        %v1087 = vpop.f32.mrf.mxu0
        %1088 = vmatprep.mubr.f32.mxu0 0.0
        %1089 = vmatmul.mubr.f32.gmra.mxu0 %v957
        %v1090 = vpop.f32.mrf.mxu0
        %v1091 = vadd.f32 %v898, %v1090
        %v1092 = vpop.f32.mrf.mxu0
        %1093 = vmatprep.mubr.f32.mxu0 0.0
        %1094 = vmatmul.mubr.f32.gmra.mxu0 %v960
        %v1095 = vpop.f32.mrf.mxu0
        %v1096 = vadd.f32 %v903, %v1095
        %v1097 = vpop.f32.mrf.mxu0
        %1098 = vmatprep.mubr.f32.mxu0 0.0
        %1099 = vmatmul.mubr.f32.gmra.mxu0 %v963
        %v1100 = vpop.f32.mrf.mxu0
        %v1101 = vadd.f32 %v908, %v1100
        %v1102 = vpop.f32.mrf.mxu0
        %1103 = vmatprep.mubr.f32.mxu0 0.0
        %1104 = vmatmul.mubr.f32.gmra.mxu0 %v966
        %v1105 = vpop.f32.mrf.mxu0
        %v1106 = vadd.f32 %v913, %v1105
        %v1107 = vpop.f32.mrf.mxu0
        %1108 = vmatprep.mubr.f32.mxu0 0.0
        %1109 = vmatmul.mubr.f32.gmra.mxu0 %v969
        %v1110 = vpop.f32.mrf.mxu0
        %v1111 = vadd.f32 %v918, %v1110
        %v1112 = vpop.f32.mrf.mxu0
        %1113 = vmatprep.mubr.f32.mxu0 0.0
        %1114 = vmatmul.mubr.f32.gmra.mxu0 %v972
        %v1115 = vpop.f32.mrf.mxu0
        %v1116 = vadd.f32 %v923, %v1115
        %v1117 = vpop.f32.mrf.mxu0
        %1118 = vdwg.mxu0
        %v1119 = vld [vmem:[%s7] sm:$0x1]
        %v1121 = vlaneseq
        %v1122 = vshrl.u32 %v1121, 7
        %v1123 = vsub.s32 0, %v1122
        %v1124 = vrot.slane %v1119, %v1123
        %v1126 = vadd.f32 %v1041, %v1124
        %v1127 = vadd.f32 %v1046, %v1124
        %v1128 = vadd.f32 %v1051, %v1124
        %v1129 = vadd.f32 %v1056, %v1124
        %v1130 = vadd.f32 %v1061, %v1124
        %v1131 = vadd.f32 %v1066, %v1124
        %v1132 = vadd.f32 %v1071, %v1124
        %v1133 = vadd.f32 %v1076, %v1124
        %v1134 = vadd.f32 %v1081, %v1124
        %v1135 = vadd.f32 %v1086, %v1124
        %v1136 = vadd.f32 %v1091, %v1124
        %v1137 = vadd.f32 %v1096, %v1124
        %v1138 = vadd.f32 %v1101, %v1124
        %v1139 = vadd.f32 %v1106, %v1124
        %v1140 = vadd.f32 %v1111, %v1124
        %v1141 = vadd.f32 %v1116, %v1124
        %v1142 = vmax.f32 %v1126, 0.0
        %v1143 = vmax.f32 %v1127, 0.0
        %v1144 = vmax.f32 %v1128, 0.0
        %v1145 = vmax.f32 %v1129, 0.0
        %v1146 = vmax.f32 %v1130, 0.0
        %v1147 = vmax.f32 %v1131, 0.0
        %v1148 = vmax.f32 %v1132, 0.0
        %v1149 = vmax.f32 %v1133, 0.0
        %v1150 = vmax.f32 %v1134, 0.0
        %v1151 = vmax.f32 %v1135, 0.0
        %v1152 = vmax.f32 %v1136, 0.0
        %v1153 = vmax.f32 %v1137, 0.0
        %v1154 = vmax.f32 %v1138, 0.0
        %v1155 = vmax.f32 %v1139, 0.0
        %v1156 = vmax.f32 %v1140, 0.0
        %v1157 = vmax.f32 %v1141, 0.0
        %1158 = vst [vmem:[%s299] sm:$0xff] %v1142
        %1159 = vst [vmem:[%s299 + $0x8] sm:$0xff] %v1143
        %1160 = vst [vmem:[%s299 + $0x10] sm:$0xff] %v1144
        %1161 = vst [vmem:[%s299 + $0x18] sm:$0xff] %v1145
        %1162 = vst [vmem:[%s299 + $0x20] sm:$0xff] %v1146
        %1163 = vst [vmem:[%s299 + $0x28] sm:$0xff] %v1147
        %1164 = vst [vmem:[%s299 + $0x30] sm:$0xff] %v1148
        %1165 = vst [vmem:[%s299 + $0x38] sm:$0xff] %v1149
        %1166 = vst [vmem:[%s299 + $0x40] sm:$0xff] %v1150
        %1167 = vst [vmem:[%s299 + $0x48] sm:$0xff] %v1151
        %1168 = vst [vmem:[%s299 + $0x50] sm:$0xff] %v1152
        %1169 = vst [vmem:[%s299 + $0x58] sm:$0xff] %v1153
        %1170 = vst [vmem:[%s299 + $0x60] sm:$0xff] %v1154
        %1171 = vst [vmem:[%s299 + $0x68] sm:$0xff] %v1155
        %1172 = vst [vmem:[%s299 + $0x70] sm:$0xff] %v1156
        %1173 = vst [vmem:[%s299 + $0x78] sm:$0xff] %v1157
        %s1174 = sand.u32 %s203, 1
        %s1175 = scalar_lea.sflag [#allocation3], %s1174
        %s1176 = sand.u32 %s203, 1
        %s1177 = smul.addr %s1176, 128
        %s1178 = scalar_lea.vmem [#allocation2], %s1177
        // Predicated region
        $region53: #{tpu_custom_call.1} parent=51 // pred_check
          %p1179 = pneg %p213
        $region54: #{tpu_custom_call.1} parent=51 // pred_check_branch
          %1181 = sbr.rel (%p1179) target = $region56
        $region55: #{tpu_custom_call.1} parent=51 // pred_region
          %s1182 = smul.u32 16, %s22
          %s1184 = ssub.s32 2048, 2048
          %1185 = vsyncadd %s1175, %s1184
          %s1186 = smul.addr %s1182, 128
          %s1187 = scalar_lea.hbm %s8, %s1186
          %s1188 = sshll.u32 %s1178, 4
          %s1189 = int_to_ptr.vmem [resolvable:$true] %s1188
          %1194 = dma.vmem_to_hbm [thread:$0]  %s1189, 2048, %s1187, %s1175, 128, 128, 8
        $region56: #{tpu_custom_call.1} parent=51 // pred_fallthru
          _
      $region52: #{tpu_custom_call.1} parent=5 // pred_fallthru
        _
      %p1195 = scmp.le.s32.totalorder 2, %s17
      // Predicated region
      $region57: #{tpu_custom_call.1} parent=5 // pred_check
        %p1196 = pneg %p1195
      $region58: #{tpu_custom_call.1} parent=5 // pred_check_branch
        %1198 = sbr.rel (%p1196) target = $region60
      $region59: #{tpu_custom_call.1} parent=5 // pred_region
        %s1199 = ssub.s32 %s17, 2
        // Predicated region
        $region61: #{tpu_custom_call.1} parent=59 // pred_check
          %p1200 = pneg %p219
        $region62: #{tpu_custom_call.1} parent=59 // pred_check_branch
          %1202 = sbr.rel (%p1200) target = $region64
        $region63: #{tpu_custom_call.1} parent=59 // pred_region
          %s1203 = sand.u32 %s204, 1
          %s1204 = scalar_lea.sflag [#allocation3], %s1203
          %s1205 = sand.u32 %s204, 1
          %s1206 = smul.addr %s1205, 128
          %s1207 = scalar_lea.vmem [#allocation2], %s1206
          %1208 = dma.done %s1204, 2048
        $region64: #{tpu_custom_call.1} parent=59 // pred_fallthru
          _
      $region60: #{tpu_custom_call.1} parent=5 // pred_fallthru
        _
    $region6: #{tpu_custom_call.1} parent=1 // loop_footer
      %s21 = sadd.s32 1, %s17
    $region7: #{tpu_custom_call.1} parent=1 // loop_footer_branch
      %16 = sbr.rel target = $region3
    $region8: #{tpu_custom_call.1} parent=1 // loop_exit
      _
    %1209 = vsyncpa [#allocation3], 1
    %s1210 = scalar_lea.sflag [#allocation3], 1
    %1211 = vsyncpa %s1210, 1

</llo_original>
